<compile_context>
chip_gen: v7x
topology: tpu7x:2x2x1
jax: 0.10.0
libtpu: 0.0.40
codegen_flags: <defaults>
</compile_context>

<pallas_src>
import numpy as np
import jax
import jax.numpy as jnp
from jax.experimental import pallas as pl
from jax.experimental.pallas import tpu as pltpu


# Small synthetic PSPModule configuration (original: in=2048, out=512).
IN_FEATURES = 32
OUT_FEATURES = 16
OUT_PAD = 128                                   # lane-dense output channel padding
SIZES = (1, 2, 3, 6)
BRANCH_FEATURES = IN_FEATURES // 4              # 8
STAGE_STACK = len(SIZES) * BRANCH_FEATURES      # 32  (stacked branch channels)
CAT_FEATURES = IN_FEATURES + STAGE_STACK        # true concat width (robust to SIZES changes)
BN_EPS = 1e-5


def _ceil_div(a, b):
    return -(-a // b)


def _round_up(a, m):
    return _ceil_div(a, m) * m


# Sublane-padded sizes / offsets of each stage's pooled block inside the
# stacked (SS_TOTAL, H*W) pooling matrix.
SS_REAL = [s * s for s in SIZES]                          # [1, 4, 9, 36]
SS_PADDED = [_round_up(s, 8) for s in SS_REAL]            # [8, 8, 16, 40]
SS_OFFSETS = list(np.cumsum([0] + SS_PADDED[:-1]))        # [0, 8, 16, 32]
SS_TOTAL = int(np.sum(SS_PADDED))                         # 72

# consts_32 row layout (32 lanes): [W_stage | SH row | zeros | MASK]
C32_W_OFF = 0
C32_SH_OFF = IN_FEATURES                                  # 32
C32_MASK_OFF = IN_FEATURES + 16                           # 48 (16-row aligned for bf16)
C32_ROWS = C32_MASK_OFF + SS_TOTAL                        # 120

# consts_128 row layout (128 lanes): [WB_stack | WBF | SHB row | zeros]
C128_WB_OFF = 0
C128_WBF_OFF = STAGE_STACK                                # 32
C128_SHB_OFF = STAGE_STACK + IN_FEATURES                  # 64
C128_ROWS = C128_SHB_OFF + 16                             # 80


def _pad_axis(a, axis, multiple):
    pad = (-a.shape[axis]) % multiple
    if pad == 0:
        return a
    widths = [(0, 0)] * a.ndim
    widths[axis] = (0, pad)
    return np.pad(a, widths)


def adaptive_pool_matrix(size, H, W):
    """P[(i*size+j), (h*W+w)] = 1/count for pixels in PyTorch adaptive bin (i,j)."""
    P = np.zeros((size * size, H * W), np.float32)
    for i in range(size):
        h0 = (i * H) // size
        h1 = _ceil_div((i + 1) * H, size)
        for j in range(size):
            w0 = (j * W) // size
            w1 = _ceil_div((j + 1) * W, size)
            cnt = float((h1 - h0) * (w1 - w0))
            for h in range(h0, h1):
                for w in range(w0, w1):
                    P[i * size + j, h * W + w] = 1.0 / cnt
    return P


def _interp_1d(out_size, in_size):
    """(out_size, in_size) bilinear interpolation weights, align_corners=True."""
    M = np.zeros((out_size, in_size), np.float32)
    if in_size == 1:
        M[:, 0] = 1.0
        return M
    for o in range(out_size):
        src = o * (in_size - 1) / (out_size - 1)
        i0 = min(int(np.floor(src)), in_size - 1)
        i1 = min(i0 + 1, in_size - 1)
        frac = src - i0
        M[o, i0] += 1.0 - frac
        M[o, i1] += frac
    return M


def upsample_matrix(size, H, W):
    """K[(h*W+w), (p*size+q)] = wh[h,p] * ww[w,q]  (separable bilinear)."""
    Wh = _interp_1d(H, size)
    Ww = _interp_1d(W, size)
    return np.einsum("hp,wq->hwpq", Wh, Ww).reshape(H * W, size * size).astype(np.float32)


# ----------------------------------------------------------------------------
# Pallas kernel: one grid step == one batch *block* (Bblk elements).
# ----------------------------------------------------------------------------
def psp_kernel(x_ref, p_ref, k_ref, c32_ref, c128_ref, o_ref):
    # Hoist all constant loads / broadcasts out of the batch loop.
    p_all = p_ref[...]                                               # (72, N)    bf16
    k_all = k_ref[...]                                               # (N, 72)    bf16
    w_stage = c32_ref[C32_W_OFF:C32_W_OFF + IN_FEATURES, :]          # (C, 32)    bf16
    sh = c32_ref[C32_SH_OFF:C32_SH_OFF + 1, :].astype(jnp.float32)   # (1, 32)
    mask = c32_ref[C32_MASK_OFF:C32_MASK_OFF + SS_TOTAL, :].astype(jnp.float32)  # (72, 32)
    wb = c128_ref[C128_WB_OFF:C128_WB_OFF + STAGE_STACK, :]          # (32, 128)  bf16
    wbf = c128_ref[C128_WBF_OFF:C128_WBF_OFF + IN_FEATURES, :]       # (C, 128)   bf16
    shb = c128_ref[C128_SHB_OFF:C128_SHB_OFF + 1, :].astype(jnp.float32)  # (1, 128)

    n_pix = x_ref.shape[1]
    bblk = x_ref.shape[0]
    sh_b = jnp.broadcast_to(sh, (SS_TOTAL, STAGE_STACK))             # hoisted (no per-iter CSE)
    shb_b = jnp.broadcast_to(shb, (n_pix, OUT_PAD))

    def body(b, carry):
        f = x_ref[b]                                                 # (N, C) bf16, channels-last

        # All four adaptive average pools in one MXU matmul (padded rows are 0).
        pooled = jnp.dot(p_all, f, preferred_element_type=jnp.float32)          # (72, C)

        # All four branch 1x1 convs (BN scale pre-folded) in one matmul; the
        # block mask zeroes foreign branch column-blocks AND padded pooled
        # rows, so no garbage survives into the bottleneck contraction.
        z = jnp.dot(pooled.astype(jnp.bfloat16), w_stage,
                    preferred_element_type=jnp.float32) + sh_b                  # (72, 32)
        z = jnp.maximum(z, 0.0) * mask

        # All four bottleneck row-slices in one matmul (concat eliminated).
        t = jnp.dot(z.astype(jnp.bfloat16), wb,
                    preferred_element_type=jnp.float32)                         # (72, 128)

        # Bilinear upsample of all priors + feats contribution + BN shift + ReLU.
        y = (jnp.dot(k_all, t.astype(jnp.bfloat16), preferred_element_type=jnp.float32)
             + jnp.dot(f, wbf, preferred_element_type=jnp.float32)
             + shb_b)
        o_ref[b] = jnp.maximum(y, 0.0)                               # lane-dense (N, 128) store
        return carry

    # fori_loop (vs static Python unroll) bounds live ranges; unroll small blocks.
    jax.lax.fori_loop(0, bblk, body, 0, unroll=bblk <= 4)


# ----------------------------------------------------------------------------
# Wrapper-side constant construction (BN folding, stacking, padding, bf16 cast).
# ----------------------------------------------------------------------------
def _build_constants(H, W, params):
    p_blocks, k_blocks = [], []
    for size in SIZES:
        p_blocks.append(_pad_axis(adaptive_pool_matrix(size, H, W), 0, 8))  # (ss_pad, N)
        k_blocks.append(_pad_axis(upsample_matrix(size, H, W), 1, 8))       # (N, ss_pad)
    P_all = np.concatenate(p_blocks, axis=0)                                 # (72, N)
    K_all = np.concatenate(k_blocks, axis=1)                                 # (N, 72)

    # Per-stage conv weights with BN scale folded, stacked along output channels.
    w_stage = np.concatenate(
        [np.asarray(st["weight"] * st["scale"][None, :]) for st in params["stages"]],
        axis=1).astype(np.float32)                                           # (C, 32)
    sh_row = np.concatenate(
        [np.asarray(st["shift"]) for st in params["stages"]]).astype(np.float32)  # (32,)

    # Block mask: 1 on (real pooled rows of branch k) x (channel block k); 0 on
    # padded pooled rows and foreign column blocks (explicit garbage kill).
    mask = np.zeros((SS_TOTAL, STAGE_STACK), np.float32)
    for k in range(len(SIZES)):
        mask[SS_OFFSETS[k]:SS_OFFSETS[k] + SS_REAL[k],
             k * BRANCH_FEATURES:(k + 1) * BRANCH_FEATURES] = 1.0

    # Bottleneck conv with BN scale folded; output channels padded to 128.
    bt = params["bottleneck"]
    wb_eff = np.asarray(bt["weight"] * bt["scale"][None, :]).astype(np.float32)   # (2C, O)
    wb_eff = np.pad(wb_eff, ((0, 0), (0, OUT_PAD - OUT_FEATURES)))                # (2C, 128)
    shb = np.pad(np.asarray(bt["shift"]).astype(np.float32),
                 (0, OUT_PAD - OUT_FEATURES))                                     # (128,)

    c32 = np.zeros((C32_ROWS, STAGE_STACK), np.float32)
    c32[C32_W_OFF:C32_W_OFF + IN_FEATURES] = w_stage
    c32[C32_SH_OFF] = sh_row
    c32[C32_MASK_OFF:C32_MASK_OFF + SS_TOTAL] = mask

    c128 = np.zeros((C128_ROWS, OUT_PAD), np.float32)
    c128[C128_WB_OFF:C128_WB_OFF + STAGE_STACK] = wb_eff[:STAGE_STACK]             # stage slices
    c128[C128_WBF_OFF:C128_WBF_OFF + IN_FEATURES] = wb_eff[STAGE_STACK:]           # feats slice
    c128[C128_SHB_OFF] = shb

    return (jnp.asarray(P_all, jnp.bfloat16), jnp.asarray(K_all, jnp.bfloat16),
            jnp.asarray(c32, jnp.bfloat16), jnp.asarray(c128, jnp.bfloat16))


def psp_forward(feats_nchw, params, batch_block=None):
    """Wrapper: NCHW in -> NCHW out (PyTorch convention)."""
    B, C, H, W = feats_nchw.shape
    assert C == IN_FEATURES
    N = H * W
    if batch_block is None:
        # v7x: want >= 2 grid steps (multiple of 2) so "parallel" shards across
        # both TensorCores.  v5e/v6e (single TC): prefer the largest block VMEM
        # allows to amortize ~0.35us/step; override batch_block there if needed.
        batch_block = max(1, min(8, B // 2))
    B_pad = _round_up(B, batch_block)

    x_flat = jnp.transpose(feats_nchw, (0, 2, 3, 1)).reshape(B, N, C).astype(jnp.bfloat16)
    if B_pad != B:
        x_flat = jnp.pad(x_flat, ((0, B_pad - B), (0, 0), (0, 0)))

    P_all, K_all, c32, c128 = _build_constants(H, W, params)

    out_flat = pl.pallas_call(
        psp_kernel,
        out_shape=jax.ShapeDtypeStruct((B_pad, N, OUT_PAD), jnp.float32),
        grid_spec=pltpu.PrefetchScalarGridSpec(
            num_scalar_prefetch=0,
            grid=(B_pad // batch_block,),
            in_specs=[
                pl.BlockSpec((batch_block, N, C), lambda b: (b, 0, 0)),
                pl.BlockSpec(P_all.shape, lambda b: (0, 0)),
                pl.BlockSpec(K_all.shape, lambda b: (0, 0)),
                pl.BlockSpec(c32.shape, lambda b: (0, 0)),
                pl.BlockSpec(c128.shape, lambda b: (0, 0)),
            ],
            out_specs=pl.BlockSpec((batch_block, N, OUT_PAD), lambda b: (b, 0, 0)),
        ),
        compiler_params=pltpu.CompilerParams(
            dimension_semantics=("parallel",),        # batch steps shard across TCs (v7x)
            vmem_limit_bytes=32 * 1024 * 1024),       # safe on all generations at toy scale
    )(x_flat, P_all, K_all, c32, c128)

    out = out_flat[:B, :, :OUT_FEATURES]
    return jnp.transpose(out.reshape(B, H, W, OUT_FEATURES), (0, 3, 1, 2))


# ----------------------------------------------------------------------------
# Deterministic parameter initialization (shapes from PSPModule.__init__).
# ----------------------------------------------------------------------------
def _bn_scale_shift(kg, kb, km, kv, c):
    gamma = 1.0 + 0.1 * jax.random.normal(kg, (c,), jnp.float32)
    beta = 0.1 * jax.random.normal(kb, (c,), jnp.float32)
    mean = 0.1 * jax.random.normal(km, (c,), jnp.float32)
    var = jax.random.uniform(kv, (c,), jnp.float32, 0.5, 1.5)
    scale = gamma / jnp.sqrt(var + BN_EPS)
    shift = beta - mean * scale
    return scale, shift


def init_params(key):
    stages = []
    for _ in SIZES:
        key, kw, kg, kb, km, kv = jax.random.split(key, 6)
        weight = 0.1 * jax.random.normal(kw, (IN_FEATURES, BRANCH_FEATURES), jnp.float32)
        scale, shift = _bn_scale_shift(kg, kb, km, kv, BRANCH_FEATURES)
        stages.append(dict(weight=weight, scale=scale, shift=shift))
    key, kw, kg, kb, km, kv = jax.random.split(key, 6)
    weight = 0.05 * jax.random.normal(kw, (CAT_FEATURES, OUT_FEATURES), jnp.float32)
    scale, shift = _bn_scale_shift(kg, kb, km, kv, OUT_FEATURES)
    return dict(stages=stages, bottleneck=dict(weight=weight, scale=scale, shift=shift))


# ----------------------------------------------------------------------------
# Pure-JAX NCHW reference mirroring the PyTorch forward (for validation).
# ----------------------------------------------------------------------------
def _bilinear_upsample_ac(x, H, W):
    B, C, sh, sw = x.shape

    def coords(out, inp):
        if inp == 1:
            z = np.zeros((out,), np.int32)
            return z, z, np.zeros((out,), np.float32)
        src = np.arange(out) * (inp - 1) / (out - 1)
        i0 = np.minimum(np.floor(src).astype(np.int32), inp - 1)
        i1 = np.minimum(i0 + 1, inp - 1)
        return i0, i1, (src - i0).astype(np.float32)

    h0, h1, fh = coords(H, sh)
    w0, w1, fw = coords(W, sw)
    fh = fh[None, None, :, None]
    fw = fw[None, None, None, :]
    x00 = x[:, :, h0][:, :, :, w0]
    x01 = x[:, :, h0][:, :, :, w1]
    x10 = x[:, :, h1][:, :, :, w0]
    x11 = x[:, :, h1][:, :, :, w1]
    return (x00 * (1 - fh) * (1 - fw) + x01 * (1 - fh) * fw
            + x10 * fh * (1 - fw) + x11 * fh * fw)


def psp_reference(feats_nchw, params):
    B, C, H, W = feats_nchw.shape
    priors = []
    for size, st in zip(SIZES, params["stages"]):
        rows = []
        for i in range(size):
            h0 = (i * H) // size
            h1 = _ceil_div((i + 1) * H, size)
            cols = []
            for j in range(size):
                w0 = (j * W) // size
                w1 = _ceil_div((j + 1) * W, size)
                cols.append(jnp.mean(feats_nchw[:, :, h0:h1, w0:w1], axis=(2, 3)))
            rows.append(jnp.stack(cols, axis=-1))
        pooled = jnp.stack(rows, axis=-2)  # (B, C, size, size)
        y = jnp.einsum("bcij,cd->bdij", pooled, st["weight"])
        y = y * st["scale"][None, :, None, None] + st["shift"][None, :, None, None]
        y = jnp.maximum(y, 0.0)
        priors.append(_bilinear_upsample_ac(y, H, W))
    priors.append(feats_nchw)
    x = jnp.concatenate(priors, axis=1)
    y = jnp.einsum("bcij,co->boij", x, params["bottleneck"]["weight"])
    y = (y * params["bottleneck"]["scale"][None, :, None, None]
         + params["bottleneck"]["shift"][None, :, None, None])
    y = jnp.maximum(y, 0.0)
    return jnp.maximum(y, 0.0)


if __name__ == "__main__":
    B, H, W = 2, 12, 12
    key = jax.random.PRNGKey(0)
    pkey, xkey = jax.random.split(key)
    params = init_params(pkey)
    feats = jax.random.normal(xkey, (B, IN_FEATURES, H, W), jnp.float32)

    out = jax.block_until_ready(psp_forward(feats, params))
    ref = jax.block_until_ready(psp_reference(feats, params))

    assert out.shape == (B, OUT_FEATURES, H, W)
    # Tolerance loosened vs the all-f32 version: MXU operands are bf16
    # (f32 accumulation), which costs ~0.3-0.5% relative error end-to-end.
    if not np.allclose(np.asarray(out), np.asarray(ref), rtol=1e-2, atol=1e-2):
        max_err = float(np.max(np.abs(np.asarray(out) - np.asarray(ref))))
        raise AssertionError(f"Pallas PSP output mismatch, max abs err={max_err}")
    print("KERNEL_OK")
</pallas_src>

<mosaic_0001>
module attributes {stable_mosaic.version = 11 : i64} {
  func.func @psp_kernel(%arg0: i32, %arg1: memref<1x144x32xbf16, #tpu.memory_space<vmem>>, %arg2: memref<72x144xbf16, #tpu.memory_space<vmem>>, %arg3: memref<144x72xbf16, #tpu.memory_space<vmem>>, %arg4: memref<120x32xbf16, #tpu.memory_space<vmem>>, %arg5: memref<80x128xbf16, #tpu.memory_space<vmem>>, %arg6: memref<1x144x128xf32, #tpu.memory_space<vmem>>) attributes {dimension_semantics = [#tpu.dimension_semantics<parallel>], iteration_bounds = array<i64: 2>, scalar_prefetch = 0 : i64, scratch_operands = 0 : i64, tpu.core_type = #tpu.core_type<tc>, window_params = [{transform_indices = @transform_0, window_bounds = array<i64: 1, 144, 32>}, {pipeline_mode = #tpu.pipeline_mode<synchronous>, transform_indices = @transform_1, window_bounds = array<i64: 72, 144>}, {pipeline_mode = #tpu.pipeline_mode<synchronous>, transform_indices = @transform_2, window_bounds = array<i64: 144, 72>}, {pipeline_mode = #tpu.pipeline_mode<synchronous>, transform_indices = @transform_3, window_bounds = array<i64: 120, 32>}, {pipeline_mode = #tpu.pipeline_mode<synchronous>, transform_indices = @transform_4, window_bounds = array<i64: 80, 128>}, {transform_indices = @transform_5, window_bounds = array<i64: 1, 144, 128>}]} {
    %c0 = arith.constant 0 : index
    %c0_0 = arith.constant 0 : index
    %0 = vector.load %arg2[%c0, %c0_0] : memref<72x144xbf16, #tpu.memory_space<vmem>>, vector<72x144xbf16>
    %c0_1 = arith.constant 0 : index
    %c0_2 = arith.constant 0 : index
    %1 = vector.load %arg3[%c0_1, %c0_2] : memref<144x72xbf16, #tpu.memory_space<vmem>>, vector<144x72xbf16>
    %c0_3 = arith.constant 0 : index
    %c0_4 = arith.constant 0 : index
    %2 = vector.load %arg4[%c0_3, %c0_4] : memref<120x32xbf16, #tpu.memory_space<vmem>>, vector<32x32xbf16>
    %c32 = arith.constant 32 : index
    %c0_5 = arith.constant 0 : index
    %3 = vector.load %arg4[%c32, %c0_5] : memref<120x32xbf16, #tpu.memory_space<vmem>>, vector<1x32xbf16>
    %4 = arith.extf %3 : vector<1x32xbf16> to vector<1x32xf32>
    %c48 = arith.constant 48 : index
    %c0_6 = arith.constant 0 : index
    %5 = vector.load %arg4[%c48, %c0_6] : memref<120x32xbf16, #tpu.memory_space<vmem>>, vector<72x32xbf16>
    %6 = arith.extf %5 : vector<72x32xbf16> to vector<72x32xf32>
    %c0_7 = arith.constant 0 : index
    %c0_8 = arith.constant 0 : index
    %7 = vector.load %arg5[%c0_7, %c0_8] : memref<80x128xbf16, #tpu.memory_space<vmem>>, vector<32x128xbf16>
    %c32_9 = arith.constant 32 : index
    %c0_10 = arith.constant 0 : index
    %8 = vector.load %arg5[%c32_9, %c0_10] : memref<80x128xbf16, #tpu.memory_space<vmem>>, vector<32x128xbf16>
    %c64 = arith.constant 64 : index
    %c0_11 = arith.constant 0 : index
    %9 = vector.load %arg5[%c64, %c0_11] : memref<80x128xbf16, #tpu.memory_space<vmem>>, vector<1x128xbf16>
    %10 = arith.extf %9 : vector<1x128xbf16> to vector<1x128xf32>
    %11 = vector.shape_cast %4 : vector<1x32xf32> to vector<1x32xf32>
    %12 = vector.broadcast %11 : vector<1x32xf32> to vector<72x32xf32>
    %13 = vector.shape_cast %10 : vector<1x128xf32> to vector<1x128xf32>
    %14 = vector.broadcast %13 : vector<1x128xf32> to vector<144x128xf32>
    %c0_i32 = arith.constant 0 : i32
    %15 = arith.index_cast %c0_i32 : i32 to index
    %c0_12 = arith.constant 0 : index
    %c0_13 = arith.constant 0 : index
    %16 = vector.load %arg1[%15, %c0_12, %c0_13] : memref<1x144x32xbf16, #tpu.memory_space<vmem>>, vector<1x144x32xbf16>
    %17 = vector.shape_cast %16 : vector<1x144x32xbf16> to vector<144x32xbf16>
    %cst = arith.constant dense<0.000000e+00> : vector<72x32xf32>
    %18 = tpu.matmul %0, %17, %cst {dimension_numbers = #tpu.dot_dimension_numbers<[1], [0], [0], [1], [0, 0, 1, 1], [], []>} : vector<72x144xbf16>, vector<144x32xbf16>, vector<72x32xf32> -> vector<72x32xf32>
    %19 = arith.truncf %18 : vector<72x32xf32> to vector<72x32xbf16>
    %cst_14 = arith.constant dense<0.000000e+00> : vector<72x32xf32>
    %20 = tpu.matmul %19, %2, %cst_14 {dimension_numbers = #tpu.dot_dimension_numbers<[1], [0], [0], [1], [0, 0, 1, 1], [], []>} : vector<72x32xbf16>, vector<32x32xbf16>, vector<72x32xf32> -> vector<72x32xf32>
    %21 = arith.addf %20, %12 : vector<72x32xf32>
    %cst_15 = arith.constant 0.000000e+00 : f32
    %22 = vector.broadcast %cst_15 : f32 to vector<72x32xf32>
    %23 = arith.maximumf %21, %22 : vector<72x32xf32>
    %24 = arith.mulf %23, %6 : vector<72x32xf32>
    %25 = arith.truncf %24 : vector<72x32xf32> to vector<72x32xbf16>
    %cst_16 = arith.constant dense<0.000000e+00> : vector<72x128xf32>
    %26 = tpu.matmul %25, %7, %cst_16 {dimension_numbers = #tpu.dot_dimension_numbers<[1], [0], [0], [1], [0, 0, 1, 1], [], []>} : vector<72x32xbf16>, vector<32x128xbf16>, vector<72x128xf32> -> vector<72x128xf32>
    %27 = arith.truncf %26 : vector<72x128xf32> to vector<72x128xbf16>
    %cst_17 = arith.constant dense<0.000000e+00> : vector<144x128xf32>
    %28 = tpu.matmul %1, %27, %cst_17 {dimension_numbers = #tpu.dot_dimension_numbers<[1], [0], [0], [1], [0, 0, 1, 1], [], []>} : vector<144x72xbf16>, vector<72x128xbf16>, vector<144x128xf32> -> vector<144x128xf32>
    %cst_18 = arith.constant dense<0.000000e+00> : vector<144x128xf32>
    %29 = tpu.matmul %17, %8, %cst_18 {dimension_numbers = #tpu.dot_dimension_numbers<[1], [0], [0], [1], [0, 0, 1, 1], [], []>} : vector<144x32xbf16>, vector<32x128xbf16>, vector<144x128xf32> -> vector<144x128xf32>
    %30 = arith.addf %28, %29 : vector<144x128xf32>
    %31 = arith.addf %30, %14 : vector<144x128xf32>
    %cst_19 = arith.constant 0.000000e+00 : f32
    %32 = vector.broadcast %cst_19 : f32 to vector<144x128xf32>
    %33 = arith.maximumf %31, %32 : vector<144x128xf32>
    %34 = arith.index_cast %c0_i32 : i32 to index
    %c0_20 = arith.constant 0 : index
    %c0_21 = arith.constant 0 : index
    %35 = vector.load %arg6[%34, %c0_20, %c0_21] : memref<1x144x128xf32, #tpu.memory_space<vmem>>, vector<1x144x128xf32>
    %36 = vector.shape_cast %35 : vector<1x144x128xf32> to vector<144x128xf32>
    %37 = vector.shape_cast %33 : vector<144x128xf32> to vector<1x144x128xf32>
    tpu.vector_store %arg6[%34, %c0_20, %c0_21], %37 {strides = array<i32>} : memref<1x144x128xf32, #tpu.memory_space<vmem>>, vector<1x144x128xf32>,
    %c1_i32 = arith.constant 1 : i32
    return
  }
  func.func @transform_0(%arg0: i32) -> (i32, i32, i32) {
    %c0_i32 = arith.constant 0 : i32
    %c0_i32_0 = arith.constant 0 : i32
    %c0_i32_1 = arith.constant 0 : i32
    return %arg0, %c0_i32, %c0_i32_0 : i32, i32, i32
  }
  func.func @transform_1(%arg0: i32) -> (i32, i32) {
    %c0_i32 = arith.constant 0 : i32
    %c0_i32_0 = arith.constant 0 : i32
    %c0_i32_1 = arith.constant 0 : i32
    return %c0_i32, %c0_i32_0 : i32, i32
  }
  func.func @transform_2(%arg0: i32) -> (i32, i32) {
    %c0_i32 = arith.constant 0 : i32
    %c0_i32_0 = arith.constant 0 : i32
    %c0_i32_1 = arith.constant 0 : i32
    return %c0_i32, %c0_i32_0 : i32, i32
  }
  func.func @transform_3(%arg0: i32) -> (i32, i32) {
    %c0_i32 = arith.constant 0 : i32
    %c0_i32_0 = arith.constant 0 : i32
    %c0_i32_1 = arith.constant 0 : i32
    return %c0_i32, %c0_i32_0 : i32, i32
  }
  func.func @transform_4(%arg0: i32) -> (i32, i32) {
    %c0_i32 = arith.constant 0 : i32
    %c0_i32_0 = arith.constant 0 : i32
    %c0_i32_1 = arith.constant 0 : i32
    return %c0_i32, %c0_i32_0 : i32, i32
  }
  func.func @transform_5(%arg0: i32) -> (i32, i32, i32) {
    %c0_i32 = arith.constant 0 : i32
    %c0_i32_0 = arith.constant 0 : i32
    %c0_i32_1 = arith.constant 0 : i32
    return %arg0, %c0_i32, %c0_i32_0 : i32, i32, i32
  }
}

</mosaic_0001>

<llo_original>
// kernel: tpu_custom_call.1
$region0: #{tpu_custom_call.1}
  #allocation0 [shape = 'u32[]', space=smem, size = 0x4, offset = 0x4, fixed_abs, tag = 'smem constant byte address 0x4 - core index']
  #allocation1 [shape = 'u32[144,128]{1,0:T(1,128)}', space=vmem, size = 0x12000, scoped, tag = 'internal scratch']
  %s0 = inlined_call_operand.vmem [shape: bf16[2,144,32], index: 0, kind: input, shape index: {}]
  %s1 = inlined_call_operand.vmem [shape: bf16[72,144], index: 1, kind: input, shape index: {}]
  %s2 = inlined_call_operand.vmem [shape: bf16[144,72], index: 2, kind: input, shape index: {}]
  %s3 = inlined_call_operand.vmem [shape: bf16[120,32], index: 3, kind: input, shape index: {}]
  %s4 = inlined_call_operand.vmem [shape: bf16[80,128], index: 4, kind: input, shape index: {}]
  %s5 = inlined_call_operand.hbm [shape: f32[2,144,128], index: 5, kind: output, shape index: {}]
  %s6 = sld [smem:[#allocation0]]
  $region53: #{tpu_custom_call.1} parent=0
    _
  %s8 = ssub.s32 1, %s6
  %s9 = scalar_select 0, %s8, %s6
  $region1: #{tpu_custom_call.1} parent=0
    #allocation2 [shape = 'u8[147456]{0}', space=vmem, size = 0x24000, scoped, tag = 'output window, operand 0']
    #allocation3 [shape = 's32[2]{0}', space=sflag, size = 0x8, scoped, tag = 'scoped memory for tpu_custom_call.1']
    %10 = vsyncpa [#allocation3], 0
    %s11 = scalar_lea.sflag [#allocation3], 1
    %12 = vsyncpa %s11, 0
    loop: start=0, step=1, limit=4
    $region2: #{tpu_custom_call.1} parent=1 // loop_pre_header
      _
    $region3: #{tpu_custom_call.1} parent=1 // loop_header
      %s14 = sphi 0, %s18
      %p15 = scmp.ge.s32.totalorder %s14, 4
      %s24 = sphi 0, %s26
      %s27 = sphi 0, %s24
      %s28 = sphi 0, %s27
      %s44 = sphi 0, %s28
      %s48 = sphi 0, %s48
      %s50 = sphi 0, %s48
      %s51 = sphi 0, %s50
      %s65 = sphi 0, %s51
      %s69 = sphi 0, %s69
      %s71 = sphi 0, %s69
      %s72 = sphi 0, %s71
      %s86 = sphi 0, %s72
      %s90 = sphi 0, %s90
      %s92 = sphi 0, %s90
      %s93 = sphi 0, %s92
      %s107 = sphi 0, %s93
      %s111 = sphi 0, %s111
      %s113 = sphi 0, %s111
      %s114 = sphi 0, %s113
      %s128 = sphi 0, %s114
      %s134 = sphi 0, %s136
      %s137 = sphi 0, %s134
      %s138 = sphi 0, %s137
      %s154 = sphi 0, %s138
    $region4: #{tpu_custom_call.1} parent=1 // loop_header_branch
      %17 = sbr.rel (%p15) target = $region8
    $region5: #{tpu_custom_call.1} parent=1 // loop_body
      %s19 = ssub.s32 %s14, 1
      %s20 = ssub.s32 %s14, 2
      %s21 = sadd.s32 %s14, 1
      %s22 = ssub.s32 %s14, %s21
      %p23 = scmp.eq.s32.totalorder %s22, 0
      %s25 = sadd.s32 %s24, 1
      %s26 = scalar_select %p23, %s24, %s25
      %p29 = pneg %p23
      %p30 = scmp.eq.s32.totalorder %s14, 1
      %p31 = por %p29, %p30
      %p32 = scmp.ne.s32.totalorder %s24, %s27
      %p33 = scmp.eq.s32.totalorder %s14, 0
      %p34 = por %p32, %p33
      %p35 = scmp.ne.s32.totalorder %s24, %s27
      %p36 = scmp.eq.s32.totalorder %s19, 1
      %p37 = por %p35, %p36
      %p38 = scmp.ne.s32.totalorder %s27, %s28
      %p39 = scmp.eq.s32.totalorder %s19, 0
      %p40 = por %p38, %p39
      %p41 = scmp.ne.s32.totalorder %s27, %s28
      %p42 = scmp.eq.s32.totalorder %s20, 1
      %p43 = por %p41, %p42
      %p45 = scmp.ne.s32.totalorder %s28, %s44
      %p46 = scmp.eq.s32.totalorder %s20, 0
      %p47 = por %p45, %p46
      %s49 = sadd.s32 %s48, 1
      %p52 = scmp.eq.s32.totalorder %s14, 1
      %p53 = scmp.ne.s32.totalorder %s48, %s50
      %p54 = scmp.eq.s32.totalorder %s14, 0
      %p55 = por %p53, %p54
      %p56 = scmp.ne.s32.totalorder %s48, %s50
      %p57 = scmp.eq.s32.totalorder %s19, 1
      %p58 = por %p56, %p57
      %p59 = scmp.ne.s32.totalorder %s50, %s51
      %p60 = scmp.eq.s32.totalorder %s19, 0
      %p61 = por %p59, %p60
      %p62 = scmp.ne.s32.totalorder %s50, %s51
      %p63 = scmp.eq.s32.totalorder %s20, 1
      %p64 = por %p62, %p63
      %p66 = scmp.ne.s32.totalorder %s51, %s65
      %p67 = scmp.eq.s32.totalorder %s20, 0
      %p68 = por %p66, %p67
      %s70 = sadd.s32 %s69, 1
      %p73 = scmp.eq.s32.totalorder %s14, 1
      %p74 = scmp.ne.s32.totalorder %s69, %s71
      %p75 = scmp.eq.s32.totalorder %s14, 0
      %p76 = por %p74, %p75
      %p77 = scmp.ne.s32.totalorder %s69, %s71
      %p78 = scmp.eq.s32.totalorder %s19, 1
      %p79 = por %p77, %p78
      %p80 = scmp.ne.s32.totalorder %s71, %s72
      %p81 = scmp.eq.s32.totalorder %s19, 0
      %p82 = por %p80, %p81
      %p83 = scmp.ne.s32.totalorder %s71, %s72
      %p84 = scmp.eq.s32.totalorder %s20, 1
      %p85 = por %p83, %p84
      %p87 = scmp.ne.s32.totalorder %s72, %s86
      %p88 = scmp.eq.s32.totalorder %s20, 0
      %p89 = por %p87, %p88
      %s91 = sadd.s32 %s90, 1
      %p94 = scmp.eq.s32.totalorder %s14, 1
      %p95 = scmp.ne.s32.totalorder %s90, %s92
      %p96 = scmp.eq.s32.totalorder %s14, 0
      %p97 = por %p95, %p96
      %p98 = scmp.ne.s32.totalorder %s90, %s92
      %p99 = scmp.eq.s32.totalorder %s19, 1
      %p100 = por %p98, %p99
      %p101 = scmp.ne.s32.totalorder %s92, %s93
      %p102 = scmp.eq.s32.totalorder %s19, 0
      %p103 = por %p101, %p102
      %p104 = scmp.ne.s32.totalorder %s92, %s93
      %p105 = scmp.eq.s32.totalorder %s20, 1
      %p106 = por %p104, %p105
      %p108 = scmp.ne.s32.totalorder %s93, %s107
      %p109 = scmp.eq.s32.totalorder %s20, 0
      %p110 = por %p108, %p109
      %s112 = sadd.s32 %s111, 1
      %p115 = scmp.eq.s32.totalorder %s14, 1
      %p116 = scmp.ne.s32.totalorder %s111, %s113
      %p117 = scmp.eq.s32.totalorder %s14, 0
      %p118 = por %p116, %p117
      %p119 = scmp.ne.s32.totalorder %s111, %s113
      %p120 = scmp.eq.s32.totalorder %s19, 1
      %p121 = por %p119, %p120
      %p122 = scmp.ne.s32.totalorder %s113, %s114
      %p123 = scmp.eq.s32.totalorder %s19, 0
      %p124 = por %p122, %p123
      %p125 = scmp.ne.s32.totalorder %s113, %s114
      %p126 = scmp.eq.s32.totalorder %s20, 1
      %p127 = por %p125, %p126
      %p129 = scmp.ne.s32.totalorder %s114, %s128
      %p130 = scmp.eq.s32.totalorder %s20, 0
      %p131 = por %p129, %p130
      %s132 = ssub.s32 %s14, %s21
      %p133 = scmp.eq.s32.totalorder %s132, 0
      %s135 = sadd.s32 %s134, 1
      %s136 = scalar_select %p133, %s134, %s135
      %p139 = pneg %p133
      %p140 = scmp.eq.s32.totalorder %s14, 1
      %p141 = por %p139, %p140
      %p142 = scmp.ne.s32.totalorder %s134, %s137
      %p143 = scmp.eq.s32.totalorder %s14, 0
      %p144 = por %p142, %p143
      %p145 = scmp.ne.s32.totalorder %s134, %s137
      %p146 = scmp.eq.s32.totalorder %s19, 1
      %p147 = por %p145, %p146
      %p148 = scmp.ne.s32.totalorder %s137, %s138
      %p149 = scmp.eq.s32.totalorder %s19, 0
      %p150 = por %p148, %p149
      %p151 = scmp.ne.s32.totalorder %s137, %s138
      %p152 = scmp.eq.s32.totalorder %s20, 1
      %p153 = por %p151, %p152
      %p155 = scmp.ne.s32.totalorder %s138, %s154
      %p156 = scmp.eq.s32.totalorder %s20, 0
      %p157 = por %p155, %p156
      %p158 = scmp.le.s32.totalorder 1, %s14
      %p159 = scmp.lt.s32.totalorder %s14, 3
      %p160 = pnand %p158, %p159
      %p161 = pneg %p160
      // Predicated region
      $region9: #{tpu_custom_call.1} parent=5 // pred_check
        _
      $region10: #{tpu_custom_call.1} parent=5 // pred_check_branch
        %163 = sbr.rel (%p160) target = $region12
      $region11: #{tpu_custom_call.1} parent=5 // pred_region
        %s164 = ssub.s32 %s14, 1
        // Predicated region
        $region13: #{tpu_custom_call.1} parent=11 // pred_check
          %p165 = pneg %p61
        $region14: #{tpu_custom_call.1} parent=11 // pred_check_branch
          %167 = sbr.rel (%p165) target = $region16
        $region15: #{tpu_custom_call.1} parent=11 // pred_region
          _
        $region16: #{tpu_custom_call.1} parent=11 // pred_fallthru
          _
        // Predicated region
        $region17: #{tpu_custom_call.1} parent=11 // pred_check
          %p168 = pneg %p82
        $region18: #{tpu_custom_call.1} parent=11 // pred_check_branch
          %170 = sbr.rel (%p168) target = $region20
        $region19: #{tpu_custom_call.1} parent=11 // pred_region
          _
        $region20: #{tpu_custom_call.1} parent=11 // pred_fallthru
          _
        // Predicated region
        $region21: #{tpu_custom_call.1} parent=11 // pred_check
          %p171 = pneg %p103
        $region22: #{tpu_custom_call.1} parent=11 // pred_check_branch
          %173 = sbr.rel (%p171) target = $region24
        $region23: #{tpu_custom_call.1} parent=11 // pred_region
          _
        $region24: #{tpu_custom_call.1} parent=11 // pred_fallthru
          _
        // Predicated region
        $region25: #{tpu_custom_call.1} parent=11 // pred_check
          %p174 = pneg %p124
        $region26: #{tpu_custom_call.1} parent=11 // pred_check_branch
          %176 = sbr.rel (%p174) target = $region28
        $region27: #{tpu_custom_call.1} parent=11 // pred_region
          _
        $region28: #{tpu_custom_call.1} parent=11 // pred_fallthru
          _
      $region12: #{tpu_custom_call.1} parent=5 // pred_fallthru
        _
      %p177 = scmp.lt.s32.totalorder %s14, 2
      // Predicated region
      $region29: #{tpu_custom_call.1} parent=5 // pred_check
        %p178 = pneg %p177
      $region30: #{tpu_custom_call.1} parent=5 // pred_check_branch
        %180 = sbr.rel (%p178) target = $region32
      $region31: #{tpu_custom_call.1} parent=5 // pred_region
        // Predicated region
        $region33: #{tpu_custom_call.1} parent=31 // pred_check
          %p181 = pneg %p34
        $region34: #{tpu_custom_call.1} parent=31 // pred_check_branch
          %183 = sbr.rel (%p181) target = $region36
        $region35: #{tpu_custom_call.1} parent=31 // pred_region
          %p184 = scmp.lt.s32.totalorder %s14, 1
          %s185 = scalar_select %p184, %s14, 1
          %s186 = smul.addr %s185, 18
          %s187 = smul.addr %s186, 4
          %s188 = scalar_lea.vmem %s0, %s187
        $region36: #{tpu_custom_call.1} parent=31 // pred_fallthru
          _
      $region32: #{tpu_custom_call.1} parent=5 // pred_fallthru
        _
      %p189 = scmp.le.s32.totalorder 1, %s14
      %p190 = scmp.lt.s32.totalorder %s14, 3
      %p191 = pnand %p189, %p190
      %p192 = pneg %p191
      // Predicated region
      $region37: #{tpu_custom_call.1} parent=5 // pred_check
        _
      $region38: #{tpu_custom_call.1} parent=5 // pred_check_branch
        %194 = sbr.rel (%p191) target = $region40
      $region39: #{tpu_custom_call.1} parent=5 // pred_region
        %s195 = ssub.s32 %s14, 1
        %p196 = scmp.lt.s32.totalorder %s19, 1
        %s197 = scalar_select %p196, %s19, 1
        %s198 = smul.addr %s197, 18
        %s199 = smul.addr %s198, 4
        %s200 = scalar_lea.vmem %s0, %s199
        %p201 = pneg %p40
        %p202 = pneg %p37
        %p203 = pneg %p61
        %p204 = pneg %p58
        %p205 = pneg %p82
        %p206 = pneg %p79
        %p207 = pneg %p103
        %p208 = pneg %p100
        %p209 = pneg %p124
        %p210 = pneg %p121
        %p211 = pneg %p150
        %p212 = pneg %p147
        %s213 = sand.u32 %s137, 1
        %s214 = scalar_lea.sflag [#allocation3], %s213
        %s215 = sand.u32 %s137, 1
        %s216 = smul.addr %s215, 144
        %s217 = scalar_lea.vmem [#allocation2], %s216
        %p218 = scmp.lt.s32.totalorder %s19, 1
        %s219 = scalar_select %p218, %s19, 1
        %s220 = smul.addr %s219, 18
        %s221 = smul.addr %s220, 4
        %s222 = scalar_lea.vmem %s0, %s221
        %v224 = vld [vmem:[%s1] sm:$0xff]
        %v225 = vld [vmem:[%s1 + $0x8] sm:$0xff]
        %v226 = vld [vmem:[%s1 + $0x10] sm:$0xff]
        %v227 = vld [vmem:[%s1 + $0x18] sm:$0xff]
        %v228 = vld [vmem:[%s1 + $0x20] sm:$0xff]
        %v229 = vld [vmem:[%s1 + $0x28] sm:$0xff]
        %v230 = vld [vmem:[%s1 + $0x30] sm:$0xff]
        %v231 = vld [vmem:[%s1 + $0x38] sm:$0xff]
        %v232 = vld [vmem:[%s1 + $0x40] sm:$0xff]
        %v233 = vld [vmem:[%s2] sm:$0xf]
        %v234 = vld [vmem:[%s2 + $0x4] sm:$0xf]
        %v235 = vld [vmem:[%s2 + $0x8] sm:$0xf]
        %v236 = vld [vmem:[%s2 + $0xc] sm:$0xf]
        %v237 = vld [vmem:[%s2 + $0x10] sm:$0xf]
        %v238 = vld [vmem:[%s2 + $0x14] sm:$0xf]
        %v239 = vld [vmem:[%s2 + $0x18] sm:$0xf]
        %v240 = vld [vmem:[%s2 + $0x1c] sm:$0xf]
        %v241 = vld [vmem:[%s2 + $0x20] sm:$0xf]
        %v242 = vld [vmem:[%s2 + $0x24] sm:$0xf]
        %v243 = vld [vmem:[%s2 + $0x28] sm:$0xf]
        %v244 = vld [vmem:[%s2 + $0x2c] sm:$0xf]
        %v245 = vld [vmem:[%s2 + $0x30] sm:$0xf]
        %v246 = vld [vmem:[%s2 + $0x34] sm:$0xf]
        %v247 = vld [vmem:[%s2 + $0x38] sm:$0xf]
        %v248 = vld [vmem:[%s2 + $0x3c] sm:$0xf]
        %v249 = vld [vmem:[%s2 + $0x40] sm:$0xf]
        %v250 = vld [vmem:[%s2 + $0x44] sm:$0xf]
        %v251 = vld [vmem:[%s3] sm:$0xf]
        %v252 = vld [vmem:[%s3 + $0x4] sm:$0xf]
        %v253 = vld [vmem:[%s3 + $0x8] sm:$0xf]
        %v254 = vld [vmem:[%s3 + $0xc] sm:$0xf]
        %v255 = vld [vmem:[%s3 + $0x10] sm:$0x1]
        %v256 = vunpack.c.l.bf16 %v255
        %v257 = vld [vmem:[%s3 + $0x18] sm:$0xf]
        %v258 = vld [vmem:[%s3 + $0x1c] sm:$0xf]
        %v259 = vld [vmem:[%s3 + $0x20] sm:$0xf]
        %v260 = vld [vmem:[%s3 + $0x24] sm:$0xf]
        %v261 = vld [vmem:[%s3 + $0x28] sm:$0xf]
        %v262 = vld [vmem:[%s3 + $0x2c] sm:$0xf]
        %v263 = vld [vmem:[%s3 + $0x30] sm:$0xf]
        %v264 = vld [vmem:[%s3 + $0x34] sm:$0xf]
        %v265 = vld [vmem:[%s3 + $0x38] sm:$0xf]
        %v266 = vunpack.c.l.bf16 %v257
        %v267 = vunpack.c.l.bf16 %v258
        %v268 = vunpack.c.l.bf16 %v259
        %v269 = vunpack.c.l.bf16 %v260
        %v270 = vunpack.c.l.bf16 %v261
        %v271 = vunpack.c.l.bf16 %v262
        %v272 = vunpack.c.l.bf16 %v263
        %v273 = vunpack.c.l.bf16 %v264
        %v274 = vunpack.c.l.bf16 %v265
        %v275 = vld [vmem:[%s4] sm:$0xf]
        %v276 = vld [vmem:[%s4 + $0x4] sm:$0xf]
        %v277 = vld [vmem:[%s4 + $0x8] sm:$0xf]
        %v278 = vld [vmem:[%s4 + $0xc] sm:$0xf]
        %v279 = vld [vmem:[%s4 + $0x10] sm:$0xf]
        %v280 = vld [vmem:[%s4 + $0x14] sm:$0xf]
        %v281 = vld [vmem:[%s4 + $0x18] sm:$0xf]
        %v282 = vld [vmem:[%s4 + $0x1c] sm:$0xf]
        %v283 = vld [vmem:[%s4 + $0x20] sm:$0x1]
        %v284 = vunpack.c.l.bf16 %v283
        %v285 = vlaneseq
        %v286 = vshrl.u32 %v285, 7
        %v287 = vsub.s32 0, %v286
        %v288 = vrot.slane %v256, %v287
        %v289 = vlaneseq
        %v290 = vshrl.u32 %v289, 7
        %v291 = vsub.s32 0, %v290
        %v292 = vrot.slane %v284, %v291
        %v293 = vld [vmem:[%s222] sm:$0xf]
        %v294 = vld [vmem:[%s222 + $0x4] sm:$0xf]
        %v295 = vld [vmem:[%s222 + $0x8] sm:$0xf]
        %v296 = vld [vmem:[%s222 + $0xc] sm:$0xf]
        %v297 = vld [vmem:[%s222 + $0x10] sm:$0xf]
        %v298 = vld [vmem:[%s222 + $0x14] sm:$0xf]
        %v299 = vld [vmem:[%s222 + $0x18] sm:$0xf]
        %v300 = vld [vmem:[%s222 + $0x1c] sm:$0xf]
        %v301 = vld [vmem:[%s222 + $0x20] sm:$0xf]
        %v302 = vld [vmem:[%s222 + $0x24] sm:$0xf]
        %v303 = vld [vmem:[%s222 + $0x28] sm:$0xf]
        %v304 = vld [vmem:[%s222 + $0x2c] sm:$0xf]
        %v305 = vld [vmem:[%s222 + $0x30] sm:$0xf]
        %v306 = vld [vmem:[%s222 + $0x34] sm:$0xf]
        %v307 = vld [vmem:[%s222 + $0x38] sm:$0xf]
        %v308 = vld [vmem:[%s222 + $0x3c] sm:$0xf]
        %v309 = vld [vmem:[%s222 + $0x40] sm:$0xf]
        %v310 = vld [vmem:[%s222 + $0x44] sm:$0xf]
        %v320 = vunpack.c.l.b16 %v224
        %v321 = vunpack.c.h.b16 %v224
        %v322 = vunpack.c.l.b16 %v225
        %v323 = vunpack.c.h.b16 %v225
        %v324 = vunpack.c.l.b16 %v226
        %v325 = vunpack.c.h.b16 %v226
        %v326 = vunpack.c.l.b16 %v227
        %v327 = vunpack.c.h.b16 %v227
        %v328 = vunpack.c.l.b16 %v228
        %v329 = vunpack.c.h.b16 %v228
        %v330 = vunpack.c.l.b16 %v229
        %v331 = vunpack.c.h.b16 %v229
        %v332 = vunpack.c.l.b16 %v230
        %v333 = vunpack.c.h.b16 %v230
        %v334 = vunpack.c.l.b16 %v231
        %v335 = vunpack.c.h.b16 %v231
        %v336 = vunpack.c.l.b16 %v232
        %v337 = vunpack.c.h.b16 %v232
        %v338 = vpack.c.b16 %v322, %v320
        %v339 = vpack.c.b16 %v323, %v321
        %v340 = vpack.c.b16 %v326, %v324
        %v341 = vpack.c.b16 %v327, %v325
        %v342 = vpack.c.b16 %v330, %v328
        %v343 = vpack.c.b16 %v331, %v329
        %v344 = vpack.c.b16 %v334, %v332
        %v345 = vpack.c.b16 %v335, %v333
        %v346 = vpack.c.b16 %v336, %v336
        %v347 = vpack.c.b16 %v337, %v337
        %v371 = vunpack.c.l.b16 %v293
        %v372 = vunpack.c.l.b16 %v294
        %v373 = vunpack.c.l.b16 %v295
        %v374 = vunpack.c.l.b16 %v296
        %v375 = vunpack.c.l.b16 %v297
        %v376 = vunpack.c.l.b16 %v298
        %v377 = vunpack.c.l.b16 %v299
        %v378 = vunpack.c.l.b16 %v300
        %v379 = vunpack.c.l.b16 %v301
        %v380 = vunpack.c.l.b16 %v302
        %v381 = vunpack.c.l.b16 %v303
        %v382 = vunpack.c.l.b16 %v304
        %v383 = vunpack.c.l.b16 %v305
        %v384 = vunpack.c.l.b16 %v306
        %v385 = vunpack.c.l.b16 %v307
        %v386 = vunpack.c.l.b16 %v308
        %v387 = vunpack.c.l.b16 %v309
        %v388 = vunpack.c.l.b16 %v310
        %v389 = vpack.c.b16 %v372, %v371
        %v390 = vpack.c.b16 %v374, %v373
        %v391 = vpack.c.b16 %v376, %v375
        %v392 = vpack.c.b16 %v378, %v377
        %v393 = vpack.c.b16 %v380, %v379
        %v394 = vpack.c.b16 %v382, %v381
        %v395 = vpack.c.b16 %v384, %v383
        %v396 = vpack.c.b16 %v386, %v385
        %v397 = vpack.c.b16 %v388, %v387
        %vm407 = vcmask 130048
        %v409 = vsel %vm407, %v339, 0
        %v412 = vsel %vm407, %v341, 0
        %v415 = vsel %vm407, %v343, 0
        %v418 = vsel %vm407, %v345, 0
        %v421 = vsel %vm407, %v347, 0
        %423 = vmatprep.subr.bf16.mxu0 0
        %424 = vmatpush1.bf16.msra.mxu0 %v389
        %425 = vmatprep.subr.bf16.mxu0 0
        %426 = vmatpush1.bf16.msra.mxu0 %v390
        %427 = vmatprep.subr.bf16.mxu0 0
        %428 = vmatpush1.bf16.msra.mxu0 %v391
        %429 = vmatprep.subr.bf16.mxu0 0
        %430 = vmatpush1.bf16.msra.mxu0 %v392
        %431 = vmatprep.subr.bf16.mxu0 0
        %432 = vmatpush1.bf16.msra.mxu0 %v393
        %433 = vmatprep.subr.bf16.mxu0 0
        %434 = vmatpush1.bf16.msra.mxu0 %v394
        %435 = vmatprep.subr.bf16.mxu0 0
        %436 = vmatpush1.bf16.msra.mxu0 %v395
        %437 = vmatprep.subr.bf16.mxu0 0
        %438 = vmatpush1.bf16.msra.mxu0 %v396
        %439 = vmatprep.subr.bf16.mxu0 0
        %440 = vmatpush1.bf16.msra.mxu0 %v397
        %441 = vmatprep.subr.bf16.mxu0 0
        %442 = vmatpush1.bf16.msra.mxu0 0
        %443 = vmatprep.subr.bf16.mxu0 0
        %444 = vmatpush1.bf16.msra.mxu0 0
        %445 = vmatprep.subr.bf16.mxu0 0
        %446 = vmatpush1.bf16.msra.mxu0 0
        %447 = vmatprep.subr.bf16.mxu0 0
        %448 = vmatpush1.bf16.msra.mxu0 0
        %449 = vmatprep.subr.bf16.mxu0 0
        %450 = vmatpush1.bf16.msra.mxu0 0
        %451 = vmatprep.subr.bf16.mxu0 0
        %452 = vmatpush1.bf16.msra.mxu0 0
        %453 = vmatprep.subr.bf16.mxu0 0
        %454 = vmatpush1.bf16.msra.mxu0 0
        %455 = vmatprep.mubr.bf16.mxu0 %v409
        %456 = vmatmul.mubr.bf16.gmra.mrb[0].mxu0 %v338
        %v457 = vpop.f32.mrb[0].mxu0
        %v458 = vadd.f32 0.0, %v457
        %v459 = vpop.f32.mrb[0].mxu0
        %v460 = vpop.f32.mrb[0].mxu0
        %v461 = vadd.f32 0.0, %v460
        %v462 = vpop.f32.mrb[0].mxu0
        %463 = vmatprep.mubr.bf16.mxu0 %v412
        %464 = vmatmul.mubr.bf16.gmra.mrb[0].mxu0 %v340
        %v465 = vpop.f32.mrb[0].mxu0
        %v466 = vadd.f32 0.0, %v465
        %v467 = vpop.f32.mrb[0].mxu0
        %v468 = vpop.f32.mrb[0].mxu0
        %v469 = vadd.f32 0.0, %v468
        %v470 = vpop.f32.mrb[0].mxu0
        %471 = vmatprep.mubr.bf16.mxu0 %v415
        %472 = vmatmul.mubr.bf16.gmra.mrb[0].mxu0 %v342
        %v473 = vpop.f32.mrb[0].mxu0
        %v474 = vadd.f32 0.0, %v473
        %v475 = vpop.f32.mrb[0].mxu0
        %v476 = vpop.f32.mrb[0].mxu0
        %v477 = vadd.f32 0.0, %v476
        %v478 = vpop.f32.mrb[0].mxu0
        %479 = vmatprep.mubr.bf16.mxu0 %v418
        %480 = vmatmul.mubr.bf16.gmra.mrb[0].mxu0 %v344
        %v481 = vpop.f32.mrb[0].mxu0
        %v482 = vadd.f32 0.0, %v481
        %v483 = vpop.f32.mrb[0].mxu0
        %v484 = vpop.f32.mrb[0].mxu0
        %v485 = vadd.f32 0.0, %v484
        %v486 = vpop.f32.mrb[0].mxu0
        %487 = vmatprep.mubr.bf16.mxu0 %v421
        %488 = vmatmul.mubr.bf16.gmra.mrb[0].mxu0 %v346
        %v489 = vpop.f32.mrb[0].mxu0
        %v490 = vadd.f32 0.0, %v489
        %v491 = vpop.f32.mrb[0].mxu0
        %v492 = vpop.f32.mrb[0].mxu0
        %v493 = vpop.f32.mrb[0].mxu0
        %494 = vdwg.mxu0
        %v495 = vpack.c.bf16 %v461, %v458
        %v496 = vpack.c.bf16 %v469, %v466
        %v497 = vpack.c.bf16 %v477, %v474
        %v498 = vpack.c.bf16 %v485, %v482
        %v499 = vpack.c.bf16 %v490, %v490
        %v504 = vunpack.c.l.b16 %v251
        %v505 = vunpack.c.l.b16 %v252
        %v506 = vunpack.c.l.b16 %v253
        %v507 = vunpack.c.l.b16 %v254
        %v508 = vpack.c.b16 %v505, %v504
        %v509 = vpack.c.b16 %v507, %v506
        %vm512 = vcmask 261120
        %v514 = vsel %vm512, %v495, 0
        %v517 = vsel %vm512, %v496, 0
        %v520 = vsel %vm512, %v497, 0
        %v523 = vsel %vm512, %v498, 0
        %v526 = vsel %vm512, %v499, 0
        %528 = vmatprep.subr.bf16.mxu0 0
        %529 = vmatpush1.bf16.msra.mxu0 %v508
        %530 = vmatprep.subr.bf16.mxu0 0
        %531 = vmatpush1.bf16.msra.mxu0 %v509
        %532 = vmatprep.subr.bf16.mxu0 0
        %533 = vmatpush1.bf16.msra.mxu0 0
        %534 = vmatprep.subr.bf16.mxu0 0
        %535 = vmatpush1.bf16.msra.mxu0 0
        %536 = vmatprep.subr.bf16.mxu0 0
        %537 = vmatpush1.bf16.msra.mxu0 0
        %538 = vmatprep.subr.bf16.mxu0 0
        %539 = vmatpush1.bf16.msra.mxu0 0
        %540 = vmatprep.subr.bf16.mxu0 0
        %541 = vmatpush1.bf16.msra.mxu0 0
        %542 = vmatprep.subr.bf16.mxu0 0
        %543 = vmatpush1.bf16.msra.mxu0 0
        %544 = vmatprep.subr.bf16.mxu0 0
        %545 = vmatpush1.bf16.msra.mxu0 0
        %546 = vmatprep.subr.bf16.mxu0 0
        %547 = vmatpush1.bf16.msra.mxu0 0
        %548 = vmatprep.subr.bf16.mxu0 0
        %549 = vmatpush1.bf16.msra.mxu0 0
        %550 = vmatprep.subr.bf16.mxu0 0
        %551 = vmatpush1.bf16.msra.mxu0 0
        %552 = vmatprep.subr.bf16.mxu0 0
        %553 = vmatpush1.bf16.msra.mxu0 0
        %554 = vmatprep.subr.bf16.mxu0 0
        %555 = vmatpush1.bf16.msra.mxu0 0
        %556 = vmatprep.subr.bf16.mxu0 0
        %557 = vmatpush1.bf16.msra.mxu0 0
        %558 = vmatprep.subr.bf16.mxu0 0
        %559 = vmatpush1.bf16.msra.mxu0 0
        %560 = vmatprep.mubr.bf16.mxu0 0
        %561 = vmatmul.mubr.bf16.gmra.mrb[0].mxu0 %v514
        %v562 = vpop.f32.mrb[0].mxu0
        %v563 = vadd.f32 %v288, %v562
        %v564 = vpop.f32.mrb[0].mxu0
        %v565 = vpop.f32.mrb[0].mxu0
        %v566 = vadd.f32 %v288, %v565
        %v567 = vpop.f32.mrb[0].mxu0
        %568 = vmatprep.mubr.bf16.mxu0 0
        %569 = vmatmul.mubr.bf16.gmra.mrb[0].mxu0 %v517
        %v570 = vpop.f32.mrb[0].mxu0
        %v571 = vadd.f32 %v288, %v570
        %v572 = vpop.f32.mrb[0].mxu0
        %v573 = vpop.f32.mrb[0].mxu0
        %v574 = vadd.f32 %v288, %v573
        %v575 = vpop.f32.mrb[0].mxu0
        %576 = vmatprep.mubr.bf16.mxu0 0
        %577 = vmatmul.mubr.bf16.gmra.mrb[0].mxu0 %v520
        %v578 = vpop.f32.mrb[0].mxu0
        %v579 = vadd.f32 %v288, %v578
        %v580 = vpop.f32.mrb[0].mxu0
        %v581 = vpop.f32.mrb[0].mxu0
        %v582 = vadd.f32 %v288, %v581
        %v583 = vpop.f32.mrb[0].mxu0
        %584 = vmatprep.mubr.bf16.mxu0 0
        %585 = vmatmul.mubr.bf16.gmra.mrb[0].mxu0 %v523
        %v586 = vpop.f32.mrb[0].mxu0
        %v587 = vadd.f32 %v288, %v586
        %v588 = vpop.f32.mrb[0].mxu0
        %v589 = vpop.f32.mrb[0].mxu0
        %v590 = vadd.f32 %v288, %v589
        %v591 = vpop.f32.mrb[0].mxu0
        %592 = vmatprep.mubr.bf16.mxu0 0
        %593 = vmatmul.mubr.bf16.gmra.mrb[0].mxu0 %v526
        %v594 = vpop.f32.mrb[0].mxu0
        %v595 = vadd.f32 %v288, %v594
        %v596 = vpop.f32.mrb[0].mxu0
        %v597 = vpop.f32.mrb[0].mxu0
        %v598 = vpop.f32.mrb[0].mxu0
        %599 = vdwg.mxu0
        %v600 = vmax.f32 %v563, 0.0
        %v601 = vmax.f32 %v566, 0.0
        %v602 = vmax.f32 %v571, 0.0
        %v603 = vmax.f32 %v574, 0.0
        %v604 = vmax.f32 %v579, 0.0
        %v605 = vmax.f32 %v582, 0.0
        %v606 = vmax.f32 %v587, 0.0
        %v607 = vmax.f32 %v590, 0.0
        %v608 = vmax.f32 %v595, 0.0
        %v609 = vmul.f32 %v600, %v266
        %v610 = vmul.f32 %v601, %v267
        %v611 = vmul.f32 %v602, %v268
        %v612 = vmul.f32 %v603, %v269
        %v613 = vmul.f32 %v604, %v270
        %v614 = vmul.f32 %v605, %v271
        %v615 = vmul.f32 %v606, %v272
        %v616 = vmul.f32 %v607, %v273
        %v617 = vmul.f32 %v608, %v274
        %v618 = vpack.c.bf16 %v610, %v609
        %v619 = vpack.c.bf16 %v612, %v611
        %v620 = vpack.c.bf16 %v614, %v613
        %v621 = vpack.c.bf16 %v616, %v615
        %v622 = vpack.c.bf16 %v617, %v617
        %v627 = vunpack.c.l.b16 %v275
        %v628 = vunpack.c.l.b16 %v276
        %v629 = vunpack.c.l.b16 %v277
        %v630 = vunpack.c.l.b16 %v278
        %v631 = vpack.c.b16 %v628, %v627
        %v632 = vpack.c.b16 %v630, %v629
        %v636 = vsel %vm512, %v618, 0
        %v639 = vsel %vm512, %v619, 0
        %v642 = vsel %vm512, %v620, 0
        %v645 = vsel %vm512, %v621, 0
        %v648 = vsel %vm512, %v622, 0
        %650 = vmatprep.subr.bf16.mxu0 0
        %651 = vmatpush1.bf16.msra.mxu0 %v631
        %652 = vmatprep.subr.bf16.mxu0 0
        %653 = vmatpush1.bf16.msra.mxu0 %v632
        %654 = vmatprep.subr.bf16.mxu0 0
        %655 = vmatpush1.bf16.msra.mxu0 0
        %656 = vmatprep.subr.bf16.mxu0 0
        %657 = vmatpush1.bf16.msra.mxu0 0
        %658 = vmatprep.subr.bf16.mxu0 0
        %659 = vmatpush1.bf16.msra.mxu0 0
        %660 = vmatprep.subr.bf16.mxu0 0
        %661 = vmatpush1.bf16.msra.mxu0 0
        %662 = vmatprep.subr.bf16.mxu0 0
        %663 = vmatpush1.bf16.msra.mxu0 0
        %664 = vmatprep.subr.bf16.mxu0 0
        %665 = vmatpush1.bf16.msra.mxu0 0
        %666 = vmatprep.subr.bf16.mxu0 0
        %667 = vmatpush1.bf16.msra.mxu0 0
        %668 = vmatprep.subr.bf16.mxu0 0
        %669 = vmatpush1.bf16.msra.mxu0 0
        %670 = vmatprep.subr.bf16.mxu0 0
        %671 = vmatpush1.bf16.msra.mxu0 0
        %672 = vmatprep.subr.bf16.mxu0 0
        %673 = vmatpush1.bf16.msra.mxu0 0
        %674 = vmatprep.subr.bf16.mxu0 0
        %675 = vmatpush1.bf16.msra.mxu0 0
        %676 = vmatprep.subr.bf16.mxu0 0
        %677 = vmatpush1.bf16.msra.mxu0 0
        %678 = vmatprep.subr.bf16.mxu0 0
        %679 = vmatpush1.bf16.msra.mxu0 0
        %680 = vmatprep.subr.bf16.mxu0 0
        %681 = vmatpush1.bf16.msra.mxu0 0
        %682 = vmatprep.mubr.bf16.mxu0 0
        %683 = vmatmul.mubr.bf16.gmra.mrb[0].mxu0 %v636
        %v684 = vpop.f32.mrb[0].mxu0
        %v685 = vadd.f32 0.0, %v684
        %v686 = vpop.f32.mrb[0].mxu0
        %v687 = vpop.f32.mrb[0].mxu0
        %v688 = vadd.f32 0.0, %v687
        %v689 = vpop.f32.mrb[0].mxu0
        %690 = vmatprep.mubr.bf16.mxu0 0
        %691 = vmatmul.mubr.bf16.gmra.mrb[0].mxu0 %v639
        %v692 = vpop.f32.mrb[0].mxu0
        %v693 = vadd.f32 0.0, %v692
        %v694 = vpop.f32.mrb[0].mxu0
        %v695 = vpop.f32.mrb[0].mxu0
        %v696 = vadd.f32 0.0, %v695
        %v697 = vpop.f32.mrb[0].mxu0
        %698 = vmatprep.mubr.bf16.mxu0 0
        %699 = vmatmul.mubr.bf16.gmra.mrb[0].mxu0 %v642
        %v700 = vpop.f32.mrb[0].mxu0
        %v701 = vadd.f32 0.0, %v700
        %v702 = vpop.f32.mrb[0].mxu0
        %v703 = vpop.f32.mrb[0].mxu0
        %v704 = vadd.f32 0.0, %v703
        %v705 = vpop.f32.mrb[0].mxu0
        %706 = vmatprep.mubr.bf16.mxu0 0
        %707 = vmatmul.mubr.bf16.gmra.mrb[0].mxu0 %v645
        %v708 = vpop.f32.mrb[0].mxu0
        %v709 = vadd.f32 0.0, %v708
        %v710 = vpop.f32.mrb[0].mxu0
        %v711 = vpop.f32.mrb[0].mxu0
        %v712 = vadd.f32 0.0, %v711
        %v713 = vpop.f32.mrb[0].mxu0
        %714 = vmatprep.mubr.bf16.mxu0 0
        %715 = vmatmul.mubr.bf16.gmra.mrb[0].mxu0 %v648
        %v716 = vpop.f32.mrb[0].mxu0
        %v717 = vadd.f32 0.0, %v716
        %v718 = vpop.f32.mrb[0].mxu0
        %v719 = vpop.f32.mrb[0].mxu0
        %v720 = vpop.f32.mrb[0].mxu0
        %721 = vdwg.mxu0
        %v722 = vpack.c.bf16 %v688, %v685
        %v723 = vpack.c.bf16 %v696, %v693
        %v724 = vpack.c.bf16 %v704, %v701
        %v725 = vpack.c.bf16 %v712, %v709
        %v726 = vpack.c.bf16 %v717, %v717
        %v731 = vunpack.c.l.b16 %v279
        %v732 = vunpack.c.l.b16 %v280
        %v733 = vunpack.c.l.b16 %v281
        %v734 = vunpack.c.l.b16 %v282
        %v735 = vpack.c.b16 %v732, %v731
        %v736 = vpack.c.b16 %v734, %v733
        %v740 = vsel %vm512, %v389, 0
        %v743 = vsel %vm512, %v390, 0
        %v746 = vsel %vm512, %v391, 0
        %v749 = vsel %vm512, %v392, 0
        %v752 = vsel %vm512, %v393, 0
        %v755 = vsel %vm512, %v394, 0
        %v758 = vsel %vm512, %v395, 0
        %v761 = vsel %vm512, %v396, 0
        %v764 = vsel %vm512, %v397, 0
        %766 = vmatprep.subr.bf16.mxu0 0
        %767 = vmatpush1.bf16.msra.mxu0 %v735
        %768 = vmatprep.subr.bf16.mxu0 0
        %769 = vmatpush1.bf16.msra.mxu0 %v736
        %770 = vmatprep.subr.bf16.mxu0 0
        %771 = vmatpush1.bf16.msra.mxu0 0
        %772 = vmatprep.subr.bf16.mxu0 0
        %773 = vmatpush1.bf16.msra.mxu0 0
        %774 = vmatprep.subr.bf16.mxu0 0
        %775 = vmatpush1.bf16.msra.mxu0 0
        %776 = vmatprep.subr.bf16.mxu0 0
        %777 = vmatpush1.bf16.msra.mxu0 0
        %778 = vmatprep.subr.bf16.mxu0 0
        %779 = vmatpush1.bf16.msra.mxu0 0
        %780 = vmatprep.subr.bf16.mxu0 0
        %781 = vmatpush1.bf16.msra.mxu0 0
        %782 = vmatprep.subr.bf16.mxu0 0
        %783 = vmatpush1.bf16.msra.mxu0 0
        %784 = vmatprep.subr.bf16.mxu0 0
        %785 = vmatpush1.bf16.msra.mxu0 0
        %786 = vmatprep.subr.bf16.mxu0 0
        %787 = vmatpush1.bf16.msra.mxu0 0
        %788 = vmatprep.subr.bf16.mxu0 0
        %789 = vmatpush1.bf16.msra.mxu0 0
        %790 = vmatprep.subr.bf16.mxu0 0
        %791 = vmatpush1.bf16.msra.mxu0 0
        %792 = vmatprep.subr.bf16.mxu0 0
        %793 = vmatpush1.bf16.msra.mxu0 0
        %794 = vmatprep.subr.bf16.mxu0 0
        %795 = vmatpush1.bf16.msra.mxu0 0
        %796 = vmatprep.subr.bf16.mxu0 0
        %797 = vmatpush1.bf16.msra.mxu0 0
        %798 = vmatprep.mubr.bf16.mxu0 0
        %799 = vmatmul.mubr.bf16.gmra.mrb[0].mxu0 %v740
        %v800 = vpop.f32.mrb[0].mxu0
        %v801 = vadd.f32 0.0, %v800
        %v802 = vpop.f32.mrb[0].mxu0
        %v803 = vpop.f32.mrb[0].mxu0
        %v804 = vadd.f32 0.0, %v803
        %v805 = vpop.f32.mrb[0].mxu0
        %806 = vmatprep.mubr.bf16.mxu0 0
        %807 = vmatmul.mubr.bf16.gmra.mrb[0].mxu0 %v743
        %v808 = vpop.f32.mrb[0].mxu0
        %v809 = vadd.f32 0.0, %v808
        %v810 = vpop.f32.mrb[0].mxu0
        %v811 = vpop.f32.mrb[0].mxu0
        %v812 = vadd.f32 0.0, %v811
        %v813 = vpop.f32.mrb[0].mxu0
        %814 = vmatprep.mubr.bf16.mxu0 0
        %815 = vmatmul.mubr.bf16.gmra.mrb[0].mxu0 %v746
        %v816 = vpop.f32.mrb[0].mxu0
        %v817 = vadd.f32 0.0, %v816
        %v818 = vpop.f32.mrb[0].mxu0
        %v819 = vpop.f32.mrb[0].mxu0
        %v820 = vadd.f32 0.0, %v819
        %v821 = vpop.f32.mrb[0].mxu0
        %822 = vmatprep.mubr.bf16.mxu0 0
        %823 = vmatmul.mubr.bf16.gmra.mrb[0].mxu0 %v749
        %v824 = vpop.f32.mrb[0].mxu0
        %v825 = vadd.f32 0.0, %v824
        %v826 = vpop.f32.mrb[0].mxu0
        %v827 = vpop.f32.mrb[0].mxu0
        %v828 = vadd.f32 0.0, %v827
        %v829 = vpop.f32.mrb[0].mxu0
        %830 = vmatprep.mubr.bf16.mxu0 0
        %831 = vmatmul.mubr.bf16.gmra.mrb[0].mxu0 %v752
        %v832 = vpop.f32.mrb[0].mxu0
        %v833 = vadd.f32 0.0, %v832
        %v834 = vpop.f32.mrb[0].mxu0
        %v835 = vpop.f32.mrb[0].mxu0
        %v836 = vadd.f32 0.0, %v835
        %v837 = vpop.f32.mrb[0].mxu0
        %838 = vmatprep.mubr.bf16.mxu0 0
        %839 = vmatmul.mubr.bf16.gmra.mrb[0].mxu0 %v755
        %v840 = vpop.f32.mrb[0].mxu0
        %v841 = vadd.f32 0.0, %v840
        %v842 = vpop.f32.mrb[0].mxu0
        %v843 = vpop.f32.mrb[0].mxu0
        %v844 = vadd.f32 0.0, %v843
        %v845 = vpop.f32.mrb[0].mxu0
        %846 = vmatprep.mubr.bf16.mxu0 0
        %847 = vmatmul.mubr.bf16.gmra.mrb[0].mxu0 %v758
        %v848 = vpop.f32.mrb[0].mxu0
        %v849 = vadd.f32 0.0, %v848
        %v850 = vpop.f32.mrb[0].mxu0
        %v851 = vpop.f32.mrb[0].mxu0
        %v852 = vadd.f32 0.0, %v851
        %v853 = vpop.f32.mrb[0].mxu0
        %854 = vmatprep.mubr.bf16.mxu0 0
        %855 = vmatmul.mubr.bf16.gmra.mrb[0].mxu0 %v761
        %v856 = vpop.f32.mrb[0].mxu0
        %v857 = vadd.f32 0.0, %v856
        %v858 = vpop.f32.mrb[0].mxu0
        %v859 = vpop.f32.mrb[0].mxu0
        %v860 = vadd.f32 0.0, %v859
        %v861 = vpop.f32.mrb[0].mxu0
        %862 = vmatprep.mubr.bf16.mxu0 0
        %863 = vmatmul.mubr.bf16.gmra.mrb[0].mxu0 %v764
        %v864 = vpop.f32.mrb[0].mxu0
        %v865 = vadd.f32 0.0, %v864
        %v866 = vpop.f32.mrb[0].mxu0
        %v867 = vpop.f32.mrb[0].mxu0
        %v868 = vadd.f32 0.0, %v867
        %v869 = vpop.f32.mrb[0].mxu0
        %870 = vdwg.mxu0
        %v889 = vunpack.c.l.b16 %v233
        %v890 = vunpack.c.l.b16 %v234
        %v891 = vunpack.c.l.b16 %v235
        %v892 = vunpack.c.l.b16 %v236
        %v893 = vunpack.c.l.b16 %v237
        %v894 = vunpack.c.l.b16 %v238
        %v895 = vunpack.c.l.b16 %v239
        %v896 = vunpack.c.l.b16 %v240
        %v897 = vunpack.c.l.b16 %v241
        %v898 = vunpack.c.l.b16 %v242
        %v899 = vunpack.c.l.b16 %v243
        %v900 = vunpack.c.l.b16 %v244
        %v901 = vunpack.c.l.b16 %v245
        %v902 = vunpack.c.l.b16 %v246
        %v903 = vunpack.c.l.b16 %v247
        %v904 = vunpack.c.l.b16 %v248
        %v905 = vunpack.c.l.b16 %v249
        %v906 = vunpack.c.l.b16 %v250
        %v907 = vpack.c.b16 %v890, %v889
        %v908 = vpack.c.b16 %v892, %v891
        %v909 = vpack.c.b16 %v894, %v893
        %v910 = vpack.c.b16 %v896, %v895
        %v911 = vpack.c.b16 %v898, %v897
        %v912 = vpack.c.b16 %v900, %v899
        %v913 = vpack.c.b16 %v902, %v901
        %v914 = vpack.c.b16 %v904, %v903
        %v915 = vpack.c.b16 %v906, %v905
        %vm916 = vcmask 588800
        %v918 = vsel %vm916, %v907, 0
        %v921 = vsel %vm916, %v908, 0
        %v924 = vsel %vm916, %v909, 0
        %v927 = vsel %vm916, %v910, 0
        %v930 = vsel %vm916, %v911, 0
        %v933 = vsel %vm916, %v912, 0
        %v936 = vsel %vm916, %v913, 0
        %v939 = vsel %vm916, %v914, 0
        %v942 = vsel %vm916, %v915, 0
        %vm944 = vcmask 1043456
        %v946 = vsel %vm944, %v726, 0
        %948 = vmatprep.subr.bf16.mxu0 0
        %949 = vmatpush1.bf16.msra.mxu0 %v722
        %950 = vmatprep.subr.bf16.mxu0 0
        %951 = vmatpush1.bf16.msra.mxu0 %v723
        %952 = vmatprep.subr.bf16.mxu0 0
        %953 = vmatpush1.bf16.msra.mxu0 %v724
        %954 = vmatprep.subr.bf16.mxu0 0
        %955 = vmatpush1.bf16.msra.mxu0 %v725
        %956 = vmatprep.subr.bf16.mxu0 0
        %957 = vmatpush1.bf16.msra.mxu0 %v946
        %958 = vmatprep.subr.bf16.mxu0 0
        %959 = vmatpush1.bf16.msra.mxu0 0
        %960 = vmatprep.subr.bf16.mxu0 0
        %961 = vmatpush1.bf16.msra.mxu0 0
        %962 = vmatprep.subr.bf16.mxu0 0
        %963 = vmatpush1.bf16.msra.mxu0 0
        %964 = vmatprep.subr.bf16.mxu0 0
        %965 = vmatpush1.bf16.msra.mxu0 0
        %966 = vmatprep.subr.bf16.mxu0 0
        %967 = vmatpush1.bf16.msra.mxu0 0
        %968 = vmatprep.subr.bf16.mxu0 0
        %969 = vmatpush1.bf16.msra.mxu0 0
        %970 = vmatprep.subr.bf16.mxu0 0
        %971 = vmatpush1.bf16.msra.mxu0 0
        %972 = vmatprep.subr.bf16.mxu0 0
        %973 = vmatpush1.bf16.msra.mxu0 0
        %974 = vmatprep.subr.bf16.mxu0 0
        %975 = vmatpush1.bf16.msra.mxu0 0
        %976 = vmatprep.subr.bf16.mxu0 0
        %977 = vmatpush1.bf16.msra.mxu0 0
        %978 = vmatprep.subr.bf16.mxu0 0
        %979 = vmatpush1.bf16.msra.mxu0 0
        %980 = vmatprep.mubr.bf16.mxu0 0
        %981 = vmatmul.mubr.bf16.gmra.mrb[0].mxu0 %v918
        %v982 = vpop.f32.mrb[0].mxu0
        %v983 = vadd.f32 %v801, %v982
        %v984 = vpop.f32.mrb[0].mxu0
        %v985 = vpop.f32.mrb[0].mxu0
        %v986 = vadd.f32 %v804, %v985
        %v987 = vpop.f32.mrb[0].mxu0
        %988 = vmatprep.mubr.bf16.mxu0 0
        %989 = vmatmul.mubr.bf16.gmra.mrb[0].mxu0 %v921
        %v990 = vpop.f32.mrb[0].mxu0
        %v991 = vadd.f32 %v809, %v990
        %v992 = vpop.f32.mrb[0].mxu0
        %v993 = vpop.f32.mrb[0].mxu0
        %v994 = vadd.f32 %v812, %v993
        %v995 = vpop.f32.mrb[0].mxu0
        %996 = vmatprep.mubr.bf16.mxu0 0
        %997 = vmatmul.mubr.bf16.gmra.mrb[0].mxu0 %v924
        %v998 = vpop.f32.mrb[0].mxu0
        %v999 = vadd.f32 %v817, %v998
        %v1000 = vpop.f32.mrb[0].mxu0
        %v1001 = vpop.f32.mrb[0].mxu0
        %v1002 = vadd.f32 %v820, %v1001
        %v1003 = vpop.f32.mrb[0].mxu0
        %1004 = vmatprep.mubr.bf16.mxu0 0
        %1005 = vmatmul.mubr.bf16.gmra.mrb[0].mxu0 %v927
        %v1006 = vpop.f32.mrb[0].mxu0
        %v1007 = vadd.f32 %v825, %v1006
        %v1008 = vpop.f32.mrb[0].mxu0
        %v1009 = vpop.f32.mrb[0].mxu0
        %v1010 = vadd.f32 %v828, %v1009
        %v1011 = vpop.f32.mrb[0].mxu0
        %1012 = vmatprep.mubr.bf16.mxu0 0
        %1013 = vmatmul.mubr.bf16.gmra.mrb[0].mxu0 %v930
        %v1014 = vpop.f32.mrb[0].mxu0
        %v1015 = vadd.f32 %v833, %v1014
        %v1016 = vpop.f32.mrb[0].mxu0
        %v1017 = vpop.f32.mrb[0].mxu0
        %v1018 = vadd.f32 %v836, %v1017
        %v1019 = vpop.f32.mrb[0].mxu0
        %1020 = vmatprep.mubr.bf16.mxu0 0
        %1021 = vmatmul.mubr.bf16.gmra.mrb[0].mxu0 %v933
        %v1022 = vpop.f32.mrb[0].mxu0
        %v1023 = vadd.f32 %v841, %v1022
        %v1024 = vpop.f32.mrb[0].mxu0
        %v1025 = vpop.f32.mrb[0].mxu0
        %v1026 = vadd.f32 %v844, %v1025
        %v1027 = vpop.f32.mrb[0].mxu0
        %1028 = vmatprep.mubr.bf16.mxu0 0
        %1029 = vmatmul.mubr.bf16.gmra.mrb[0].mxu0 %v936
        %v1030 = vpop.f32.mrb[0].mxu0
        %v1031 = vadd.f32 %v849, %v1030
        %v1032 = vpop.f32.mrb[0].mxu0
        %v1033 = vpop.f32.mrb[0].mxu0
        %v1034 = vadd.f32 %v852, %v1033
        %v1035 = vpop.f32.mrb[0].mxu0
        %1036 = vmatprep.mubr.bf16.mxu0 0
        %1037 = vmatmul.mubr.bf16.gmra.mrb[0].mxu0 %v939
        %v1038 = vpop.f32.mrb[0].mxu0
        %v1039 = vadd.f32 %v857, %v1038
        %v1040 = vpop.f32.mrb[0].mxu0
        %v1041 = vpop.f32.mrb[0].mxu0
        %v1042 = vadd.f32 %v860, %v1041
        %v1043 = vpop.f32.mrb[0].mxu0
        %1044 = vmatprep.mubr.bf16.mxu0 0
        %1045 = vmatmul.mubr.bf16.gmra.mrb[0].mxu0 %v942
        %v1046 = vpop.f32.mrb[0].mxu0
        %v1047 = vadd.f32 %v865, %v1046
        %v1048 = vpop.f32.mrb[0].mxu0
        %v1049 = vpop.f32.mrb[0].mxu0
        %v1050 = vadd.f32 %v868, %v1049
        %v1051 = vpop.f32.mrb[0].mxu0
        %1052 = vdwg.mxu0
        %v1053 = vadd.f32 %v983, %v292
        %v1054 = vadd.f32 %v986, %v292
        %v1055 = vadd.f32 %v991, %v292
        %v1056 = vadd.f32 %v994, %v292
        %v1057 = vadd.f32 %v999, %v292
        %v1058 = vadd.f32 %v1002, %v292
        %v1059 = vadd.f32 %v1007, %v292
        %v1060 = vadd.f32 %v1010, %v292
        %v1061 = vadd.f32 %v1015, %v292
        %v1062 = vadd.f32 %v1018, %v292
        %v1063 = vadd.f32 %v1023, %v292
        %v1064 = vadd.f32 %v1026, %v292
        %v1065 = vadd.f32 %v1031, %v292
        %v1066 = vadd.f32 %v1034, %v292
        %v1067 = vadd.f32 %v1039, %v292
        %v1068 = vadd.f32 %v1042, %v292
        %v1069 = vadd.f32 %v1047, %v292
        %v1070 = vadd.f32 %v1050, %v292
        %v1071 = vmax.f32 %v1053, 0.0
        %v1072 = vmax.f32 %v1054, 0.0
        %v1073 = vmax.f32 %v1055, 0.0
        %v1074 = vmax.f32 %v1056, 0.0
        %v1075 = vmax.f32 %v1057, 0.0
        %v1076 = vmax.f32 %v1058, 0.0
        %v1077 = vmax.f32 %v1059, 0.0
        %v1078 = vmax.f32 %v1060, 0.0
        %v1079 = vmax.f32 %v1061, 0.0
        %v1080 = vmax.f32 %v1062, 0.0
        %v1081 = vmax.f32 %v1063, 0.0
        %v1082 = vmax.f32 %v1064, 0.0
        %v1083 = vmax.f32 %v1065, 0.0
        %v1084 = vmax.f32 %v1066, 0.0
        %v1085 = vmax.f32 %v1067, 0.0
        %v1086 = vmax.f32 %v1068, 0.0
        %v1087 = vmax.f32 %v1069, 0.0
        %v1088 = vmax.f32 %v1070, 0.0
        %1089 = vst [vmem:[%s217] sm:$0xff] %v1071
        %1090 = vst [vmem:[%s217 + $0x8] sm:$0xff] %v1072
        %1091 = vst [vmem:[%s217 + $0x10] sm:$0xff] %v1073
        %1092 = vst [vmem:[%s217 + $0x18] sm:$0xff] %v1074
        %1093 = vst [vmem:[%s217 + $0x20] sm:$0xff] %v1075
        %1094 = vst [vmem:[%s217 + $0x28] sm:$0xff] %v1076
        %1095 = vst [vmem:[%s217 + $0x30] sm:$0xff] %v1077
        %1096 = vst [vmem:[%s217 + $0x38] sm:$0xff] %v1078
        %1097 = vst [vmem:[%s217 + $0x40] sm:$0xff] %v1079
        %1098 = vst [vmem:[%s217 + $0x48] sm:$0xff] %v1080
        %1099 = vst [vmem:[%s217 + $0x50] sm:$0xff] %v1081
        %1100 = vst [vmem:[%s217 + $0x58] sm:$0xff] %v1082
        %1101 = vst [vmem:[%s217 + $0x60] sm:$0xff] %v1083
        %1102 = vst [vmem:[%s217 + $0x68] sm:$0xff] %v1084
        %1103 = vst [vmem:[%s217 + $0x70] sm:$0xff] %v1085
        %1104 = vst [vmem:[%s217 + $0x78] sm:$0xff] %v1086
        %1105 = vst [vmem:[%s217 + $0x80] sm:$0xff] %v1087
        %1106 = vst [vmem:[%s217 + $0x88] sm:$0xff] %v1088
        %s1107 = sand.u32 %s137, 1
        %s1108 = scalar_lea.sflag [#allocation3], %s1107
        %s1109 = sand.u32 %s137, 1
        %s1110 = smul.addr %s1109, 144
        %s1111 = scalar_lea.vmem [#allocation2], %s1110
        // Predicated region
        $region41: #{tpu_custom_call.1} parent=39 // pred_check
          %p1112 = pneg %p147
        $region42: #{tpu_custom_call.1} parent=39 // pred_check_branch
          %1114 = sbr.rel (%p1112) target = $region44
        $region43: #{tpu_custom_call.1} parent=39 // pred_region
          %s1116 = ssub.s32 2304, 2304
          %1117 = vsyncadd %s1108, %s1116
          %s1118 = smul.addr %s19, 18
          %s1119 = smul.addr %s1118, 128
          %s1120 = scalar_lea.hbm %s5, %s1119
          %s1121 = sshll.u32 %s1111, 4
          %s1122 = int_to_ptr.vmem [resolvable:$true] %s1121
          %1127 = dma.vmem_to_hbm [thread:$0]  %s1122, 2304, %s1120, %s1108, 128, 128, 8
        $region44: #{tpu_custom_call.1} parent=39 // pred_fallthru
          _
      $region40: #{tpu_custom_call.1} parent=5 // pred_fallthru
        _
      %p1128 = scmp.le.s32.totalorder 2, %s14
      // Predicated region
      $region45: #{tpu_custom_call.1} parent=5 // pred_check
        %p1129 = pneg %p1128
      $region46: #{tpu_custom_call.1} parent=5 // pred_check_branch
        %1131 = sbr.rel (%p1129) target = $region48
      $region47: #{tpu_custom_call.1} parent=5 // pred_region
        %s1132 = ssub.s32 %s14, 2
        // Predicated region
        $region49: #{tpu_custom_call.1} parent=47 // pred_check
          %p1133 = pneg %p153
        $region50: #{tpu_custom_call.1} parent=47 // pred_check_branch
          %1135 = sbr.rel (%p1133) target = $region52
        $region51: #{tpu_custom_call.1} parent=47 // pred_region
          %s1136 = sand.u32 %s138, 1
          %s1137 = scalar_lea.sflag [#allocation3], %s1136
          %s1138 = sand.u32 %s138, 1
          %s1139 = smul.addr %s1138, 144
          %s1140 = scalar_lea.vmem [#allocation2], %s1139
          %1141 = dma.done %s1137, 2304
        $region52: #{tpu_custom_call.1} parent=47 // pred_fallthru
          _
      $region48: #{tpu_custom_call.1} parent=5 // pred_fallthru
        _
    $region6: #{tpu_custom_call.1} parent=1 // loop_footer
      %s18 = sadd.s32 1, %s14
    $region7: #{tpu_custom_call.1} parent=1 // loop_footer_branch
      %13 = sbr.rel target = $region3
    $region8: #{tpu_custom_call.1} parent=1 // loop_exit
      _
    %1142 = vsyncpa [#allocation3], 1
    %s1143 = scalar_lea.sflag [#allocation3], 1
    %1144 = vsyncpa %s1143, 1

</llo_original>
